<compile_context>
chip_gen: v7x
topology: tpu7x:2x2x1
jax: 0.10.0
libtpu: 0.0.40
codegen_flags: <defaults>
</compile_context>

<pallas_src>
import functools

import numpy as np
import jax
import jax.numpy as jnp
from jax.experimental import pallas as pl
from jax.experimental.pallas import tpu as pltpu


_LANE = 128
_MAX_TILE_ROWS = 512                     # measured ~85% of HBM roofline at 512
_TILE_VMEM_BUDGET_BYTES = 8 * 1024 * 1024  # for all double-buffered tiles


def _cdiv(a, b):
    return -(-a // b)


def _round_up(x, m):
    return _cdiv(x, m) * m


def _next_power_of_2(x):
    x = max(int(x), 1)
    return 1 << (x - 1).bit_length()


def _prev_power_of_2(x):
    x = max(int(x), 1)
    return 1 << (x.bit_length() - 1)


def _vmem_limit_bytes(n_arrays, tm, d_pad, itemsize):
    # Explicit scoped-VMEM budget (review: v7x = 64 MiB physical / 32 MiB
    # default scoped; v5e default scoped = 16 MiB).  Each auto-pipelined array
    # keeps 2 resident (tm, d_pad) buffers; the 8 MiB tile budget keeps `need`
    # far below this limit on every generation.
    need = 2 * n_arrays * tm * d_pad * itemsize
    return int(min(max(16 << 20, need + (4 << 20)), 32 << 20))


# --------------------------------------------------------------------------- #
# Kernels
# --------------------------------------------------------------------------- #

def _copy_tile_kernel(pe_ref, out_ref):
    # Bandwidth-bound lane-dense slab copy of one (tm, d_pad) tile.
    out_ref[...] = pe_ref[...]


def _add_pe_kernel(x_ref, pe_ref, o_ref):
    # Fused consumer: one (1, tm, d_model) tile of x plus the matching PE rows.
    d = o_ref.shape[-1]
    pe = pe_ref[...] if d == pe_ref.shape[-1] else pe_ref[:, :d]
    o_ref[...] = x_ref[...] + pe.astype(x_ref.dtype)[None, :, :]


# --------------------------------------------------------------------------- #
# Cached pallas_call builders (bucketing => few distinct compiles)
# --------------------------------------------------------------------------- #

@functools.lru_cache(maxsize=None)
def _build_pe_copy_call(l_pad, tm, d_pad, dtype, vmem_limit):
    grid = (l_pad // tm,)                       # l_pad is a multiple of tm
    return jax.jit(pl.pallas_call(
        _copy_tile_kernel,
        out_shape=jax.ShapeDtypeStruct((l_pad, d_pad), dtype),
        grid_spec=pltpu.PrefetchScalarGridSpec(
            num_scalar_prefetch=0,
            grid=grid,
            in_specs=[pl.BlockSpec((tm, d_pad), lambda i: (i, 0))],
            out_specs=pl.BlockSpec((tm, d_pad), lambda i: (i, 0)),
        ),
        compiler_params=pltpu.CompilerParams(
            # Rows are independent -> v7x shards the grid across both TCs.
            dimension_semantics=("parallel",),
            vmem_limit_bytes=vmem_limit,
        ),
    ))


@functools.lru_cache(maxsize=None)
def _build_add_pe_call(batch, seq_len, d_model, tm, d_pad, x_dtype, vmem_limit):
    grid = (batch, _cdiv(seq_len, tm))          # partial tail tile is masked
    return jax.jit(pl.pallas_call(
        _add_pe_kernel,
        out_shape=jax.ShapeDtypeStruct((batch, seq_len, d_model), x_dtype),
        grid_spec=pltpu.PrefetchScalarGridSpec(
            num_scalar_prefetch=0,
            grid=grid,
            in_specs=[
                pl.BlockSpec((1, tm, d_model), lambda b, i: (b, i, 0)),
                pl.BlockSpec((tm, d_pad), lambda b, i: (i, 0)),
            ],
            out_specs=pl.BlockSpec((1, tm, d_model), lambda b, i: (b, i, 0)),
        ),
        compiler_params=pltpu.CompilerParams(
            dimension_semantics=("parallel", "parallel"),
            vmem_limit_bytes=vmem_limit,
        ),
    ))


# --------------------------------------------------------------------------- #
# Module
# --------------------------------------------------------------------------- #

class PositionalEncoding:
    """JAX/Pallas port of the PyTorch PositionalEncoding module."""

    def __init__(self, d_model, max_seq_len, dtype=jnp.float32):
        self.d_model = int(d_model)
        self.max_seq_len = int(max_seq_len)

        # Float64 table construction, identical to the PyTorch __init__.
        pe64 = np.array(
            [[pos / np.power(10000, 2.0 * (j // 2) / d_model)
              for j in range(d_model)] for pos in range(max_seq_len)]
        )
        pe64[:, 0::2] = np.sin(pe64[:, 0::2])
        pe64[:, 1::2] = np.cos(pe64[:, 1::2])
        # Exact embedding weight (row 0 = pad row), kept host-side for reference.
        self.weight = np.concatenate([np.zeros((1, d_model)), pe64], axis=0)

        itemsize = int(np.dtype(dtype).itemsize)
        self._pack = max(8, 32 // itemsize)      # sublane pack: 8 f32, 16 bf16
        # Row-padding multiple: a power of two so every allowed tile size
        # divides the padded row count (=> no tile ever reads past the table).
        self._row_mult = min(_MAX_TILE_ROWS,
                             _next_power_of_2(max(max_seq_len, self._pack)))
        rows_padded = _round_up(max_seq_len, self._row_mult)
        self._d_pad = _round_up(d_model, _LANE)  # lane-dense stores even if
                                                 # d_model % 128 != 0

        table = np.zeros((rows_padded, self._d_pad), dtype=np.float64)
        table[:max_seq_len, :d_model] = pe64
        # TODO(synk): PyTorch keeps the table in float64; TPU has no f64 vector
        # path, so it is served in `dtype` (f32 default; bf16 halves HBM traffic).
        self.pe = jnp.asarray(table, dtype=dtype)   # row i == weight[i + 1]

    # ---- tiling policy -------------------------------------------------- #
    def _tile_rows(self, input_len, n_arrays, itemsize):
        # VMEM budget: each auto-pipelined array holds 2 (tm, d_pad) buffers.
        budget_tm = _TILE_VMEM_BUDGET_BYTES // (2 * n_arrays * self._d_pad * itemsize)
        # v7x: keep the row grid >= 2 so ("parallel",) uses both TensorCores.
        half = _round_up(_cdiv(input_len, 2), self._pack)
        tm = min(self._row_mult, max(budget_tm, 1), half)
        # Power-of-two multiple of the sublane pack => divides the padded rows.
        return max(self._pack, _prev_power_of_2(tm))

    # ---- exact module forward ------------------------------------------- #
    def forward(self, input_len):
        """out[i] = weight[i + 1] for i in [0, input_len)  (== sinusoid[:L]).

        NOTE: in production prefer `add_positional_encoding(x)` (fused into the
        consumer) or a plain slice of `self.pe`; this standalone copy kernel
        exists to mirror the module's forward() exactly.
        """
        if not (1 <= input_len <= self.max_seq_len):
            raise ValueError(
                f"input_len={input_len} out of range [1, {self.max_seq_len}]")
        itemsize = int(self.pe.dtype.itemsize)
        tm = self._tile_rows(input_len, 2, itemsize)
        l_pad = _round_up(input_len, tm)     # bucketed length -> few compiles
        fn = _build_pe_copy_call(
            l_pad, tm, self._d_pad, self.pe.dtype,
            _vmem_limit_bytes(2, tm, self._d_pad, itemsize))
        out = fn(self.pe)
        if out.shape != (input_len, self.d_model):
            out = out[:input_len, :self.d_model]   # strip row/lane padding
        return out

    __call__ = forward

    # ---- fused consumer path (recommended) ------------------------------ #
    def add_positional_encoding(self, x):
        """Returns x + pe[:L] (broadcast over batch) in a single fused kernel."""
        batch, seq_len, d = x.shape
        if d != self.d_model:
            raise ValueError(f"x last dim {d} != d_model {self.d_model}")
        if not (1 <= seq_len <= self.max_seq_len):
            raise ValueError(f"seq_len={seq_len} out of range")
        itemsize = max(int(x.dtype.itemsize), int(self.pe.dtype.itemsize))
        tm = self._tile_rows(seq_len, 3, itemsize)
        fn = _build_add_pe_call(
            batch, seq_len, d, tm, self._d_pad, np.dtype(x.dtype),
            _vmem_limit_bytes(3, tm, self._d_pad, itemsize))
        return fn(x, self.pe)


if __name__ == "__main__":
    d_model = 128       # multiple of 128 -> lane-dense, unmasked stores
    max_seq_len = 64
    input_len = 40      # exercises the partial-tail / bucketed-length path

    key = jax.random.PRNGKey(0)

    # f32 table (bit-comparable to the PyTorch f64 table within f32 rounding).
    pe_mod = PositionalEncoding(d_model, max_seq_len)
    out = jax.block_until_ready(pe_mod(input_len))
    ref = pe_mod.weight[np.arange(1, input_len + 1)]       # float64 reference
    assert out.shape == (input_len, d_model)
    assert np.allclose(np.asarray(out).astype(np.float64), ref,
                       rtol=1e-5, atol=1e-6), "forward mismatch vs reference"

    # A second length lands in a different (tm, l_pad) bucket; repeats reuse it.
    out_full = jax.block_until_ready(pe_mod(max_seq_len))
    assert np.allclose(np.asarray(out_full).astype(np.float64),
                       pe_mod.weight[1:max_seq_len + 1], rtol=1e-5, atol=1e-6)

    # Fused consumer path: x + pe[:L] in one pass (no materialized PE slice).
    x = jax.random.normal(key, (2, input_len, d_model), dtype=jnp.float32)
    y = jax.block_until_ready(pe_mod.add_positional_encoding(x))
    y_ref = np.asarray(x).astype(np.float64) + ref[None]
    assert y.shape == x.shape
    assert np.allclose(np.asarray(y).astype(np.float64), y_ref,
                       rtol=1e-5, atol=1e-5), "fused add mismatch vs reference"

    # bf16 table (halves HBM traffic; sublane pack of 16 handled automatically).
    pe_bf16 = PositionalEncoding(d_model, max_seq_len, dtype=jnp.bfloat16)
    out_bf16 = jax.block_until_ready(pe_bf16(input_len))
    assert out_bf16.shape == (input_len, d_model)
    assert np.allclose(np.asarray(out_bf16).astype(np.float64), ref,
                       rtol=2e-2, atol=2e-2), "bf16 forward mismatch"

    print("KERNEL_OK")
</pallas_src>

<mosaic_0001>
module attributes {stable_mosaic.version = 11 : i64} {
  func.func @_copy_tile_kernel(%arg0: i32, %arg1: memref<16x128xf32, #tpu.memory_space<vmem>>, %arg2: memref<16x128xf32, #tpu.memory_space<vmem>>) attributes {dimension_semantics = [#tpu.dimension_semantics<parallel>], iteration_bounds = array<i64: 3>, scalar_prefetch = 0 : i64, scratch_operands = 0 : i64, tpu.core_type = #tpu.core_type<tc>, window_params = [{transform_indices = @transform_0, window_bounds = array<i64: 16, 128>}, {transform_indices = @transform_1, window_bounds = array<i64: 16, 128>}]} {
    %c0 = arith.constant 0 : index
    %c0_0 = arith.constant 0 : index
    %0 = vector.load %arg1[%c0, %c0_0] : memref<16x128xf32, #tpu.memory_space<vmem>>, vector<16x128xf32>
    %c0_1 = arith.constant 0 : index
    %c0_2 = arith.constant 0 : index
    %1 = vector.load %arg2[%c0_1, %c0_2] : memref<16x128xf32, #tpu.memory_space<vmem>>, vector<16x128xf32>
    tpu.vector_store %arg2[%c0_1, %c0_2], %0 {strides = array<i32>} : memref<16x128xf32, #tpu.memory_space<vmem>>, vector<16x128xf32>,
    return
  }
  func.func @transform_0(%arg0: i32) -> (i32, i32) {
    %c0_i32 = arith.constant 0 : i32
    %c0_i32_0 = arith.constant 0 : i32
    return %arg0, %c0_i32 : i32, i32
  }
  func.func @transform_1(%arg0: i32) -> (i32, i32) {
    %c0_i32 = arith.constant 0 : i32
    %c0_i32_0 = arith.constant 0 : i32
    return %arg0, %c0_i32 : i32, i32
  }
}

</mosaic_0001>

<llo_original>
// kernel: tpu_custom_call.1
$region0: #{tpu_custom_call.1}
  #allocation0 [shape = 'u32[]', space=smem, size = 0x4, offset = 0x4, fixed_abs, tag = 'smem constant byte address 0x4 - core index']
  #allocation1 [shape = 'u32[144,128]{1,0:T(1,128)}', space=vmem, size = 0x12000, scoped, tag = 'internal scratch']
  %s0 = inlined_call_operand.hbm [shape: f32[64,128], index: 0, kind: input, shape index: {}]
  %s1 = inlined_call_operand.hbm [shape: f32[48,128], index: 1, kind: output, shape index: {}]
  %s2 = sld [smem:[#allocation0]]
  $region41: #{tpu_custom_call.1} parent=0
    _
  %s4 = ssub.s32 1, %s2
  %s5 = scalar_select 0, %s4, %s2
  $region1: #{tpu_custom_call.1} parent=0
    #allocation2 [shape = 'u8[16384]{0}', space=vmem, size = 0x4000, scoped, tag = 'input window, operand 0']
    #allocation3 [shape = 's32[2]{0}', space=sflag, size = 0x8, scoped, tag = 'scoped memory for tpu_custom_call.1']
    #allocation4 [shape = 's32[2]{0}', space=sflag, size = 0x8, scoped, tag = 'scoped memory for tpu_custom_call.1']
    #allocation5 [shape = 'u8[16384]{0}', space=vmem, size = 0x4000, scoped, tag = 'output window, operand 0']
    %6 = vsyncpa [#allocation3], 0
    %s7 = scalar_lea.sflag [#allocation3], 1
    %8 = vsyncpa %s7, 0
    %9 = vsyncpa [#allocation4], 0
    %s10 = scalar_lea.sflag [#allocation4], 1
    %11 = vsyncpa %s10, 0
    loop: start=0, step=1, limit=5
    $region2: #{tpu_custom_call.1} parent=1 // loop_pre_header
      _
    $region3: #{tpu_custom_call.1} parent=1 // loop_header
      %s13 = sphi 0, %s17
      %p14 = scmp.ge.s32.totalorder %s13, 5
      %s23 = sphi 0, %s25
      %s26 = sphi 0, %s23
      %s27 = sphi 0, %s26
      %s43 = sphi 0, %s27
      %s49 = sphi 0, %s51
      %s52 = sphi 0, %s49
      %s53 = sphi 0, %s52
      %s69 = sphi 0, %s53
    $region4: #{tpu_custom_call.1} parent=1 // loop_header_branch
      %16 = sbr.rel (%p14) target = $region8
    $region5: #{tpu_custom_call.1} parent=1 // loop_body
      %s18 = ssub.s32 %s13, 1
      %s19 = ssub.s32 %s13, 2
      %s20 = sadd.s32 %s13, 1
      %s21 = ssub.s32 %s13, %s20
      %p22 = scmp.eq.s32.totalorder %s21, 0
      %s24 = sadd.s32 %s23, 1
      %s25 = scalar_select %p22, %s23, %s24
      %p28 = pneg %p22
      %p29 = scmp.eq.s32.totalorder %s13, 2
      %p30 = por %p28, %p29
      %p31 = scmp.ne.s32.totalorder %s23, %s26
      %p32 = scmp.eq.s32.totalorder %s13, 0
      %p33 = por %p31, %p32
      %p34 = scmp.ne.s32.totalorder %s23, %s26
      %p35 = scmp.eq.s32.totalorder %s18, 2
      %p36 = por %p34, %p35
      %p37 = scmp.ne.s32.totalorder %s26, %s27
      %p38 = scmp.eq.s32.totalorder %s18, 0
      %p39 = por %p37, %p38
      %p40 = scmp.ne.s32.totalorder %s26, %s27
      %p41 = scmp.eq.s32.totalorder %s19, 2
      %p42 = por %p40, %p41
      %p44 = scmp.ne.s32.totalorder %s27, %s43
      %p45 = scmp.eq.s32.totalorder %s19, 0
      %p46 = por %p44, %p45
      %s47 = ssub.s32 %s13, %s20
      %p48 = scmp.eq.s32.totalorder %s47, 0
      %s50 = sadd.s32 %s49, 1
      %s51 = scalar_select %p48, %s49, %s50
      %p54 = pneg %p48
      %p55 = scmp.eq.s32.totalorder %s13, 2
      %p56 = por %p54, %p55
      %p57 = scmp.ne.s32.totalorder %s49, %s52
      %p58 = scmp.eq.s32.totalorder %s13, 0
      %p59 = por %p57, %p58
      %p60 = scmp.ne.s32.totalorder %s49, %s52
      %p61 = scmp.eq.s32.totalorder %s18, 2
      %p62 = por %p60, %p61
      %p63 = scmp.ne.s32.totalorder %s52, %s53
      %p64 = scmp.eq.s32.totalorder %s18, 0
      %p65 = por %p63, %p64
      %p66 = scmp.ne.s32.totalorder %s52, %s53
      %p67 = scmp.eq.s32.totalorder %s19, 2
      %p68 = por %p66, %p67
      %p70 = scmp.ne.s32.totalorder %s53, %s69
      %p71 = scmp.eq.s32.totalorder %s19, 0
      %p72 = por %p70, %p71
      %p73 = scmp.le.s32.totalorder 1, %s13
      %p74 = scmp.lt.s32.totalorder %s13, 4
      %p75 = pnand %p73, %p74
      %p76 = pneg %p75
      // Predicated region
      $region9: #{tpu_custom_call.1} parent=5 // pred_check
        _
      $region10: #{tpu_custom_call.1} parent=5 // pred_check_branch
        %78 = sbr.rel (%p75) target = $region12
      $region11: #{tpu_custom_call.1} parent=5 // pred_region
        %s79 = ssub.s32 %s13, 1
      $region12: #{tpu_custom_call.1} parent=5 // pred_fallthru
        _
      %p80 = scmp.lt.s32.totalorder %s13, 3
      // Predicated region
      $region13: #{tpu_custom_call.1} parent=5 // pred_check
        %p81 = pneg %p80
      $region14: #{tpu_custom_call.1} parent=5 // pred_check_branch
        %83 = sbr.rel (%p81) target = $region16
      $region15: #{tpu_custom_call.1} parent=5 // pred_region
        // Predicated region
        $region17: #{tpu_custom_call.1} parent=15 // pred_check
          %p84 = pneg %p33
        $region18: #{tpu_custom_call.1} parent=15 // pred_check_branch
          %86 = sbr.rel (%p84) target = $region20
        $region19: #{tpu_custom_call.1} parent=15 // pred_region
          %s87 = sand.u32 %s23, 1
          %s88 = scalar_lea.sflag [#allocation3], %s87
          %s89 = sand.u32 %s23, 1
          %s90 = smul.addr %s89, 16
          %s91 = scalar_lea.vmem [#allocation2], %s90
          %s92 = smul.u32 2, %s13
          %s94 = ssub.s32 256, 256
          %95 = vsyncadd %s88, %s94
          %s96 = smul.addr %s92, 128
          %s97 = scalar_lea.hbm %s0, %s96
          %s98 = sshll.u32 %s91, 4
          %s99 = int_to_ptr.vmem [resolvable:$true] %s98
          %104 = dma.hbm_to_vmem [thread:$0]  %s97, 256, %s99, %s88, 128, 128, 8
        $region20: #{tpu_custom_call.1} parent=15 // pred_fallthru
          _
      $region16: #{tpu_custom_call.1} parent=5 // pred_fallthru
        _
      %p105 = scmp.le.s32.totalorder 1, %s13
      %p106 = scmp.lt.s32.totalorder %s13, 4
      %p107 = pnand %p105, %p106
      %p108 = pneg %p107
      // Predicated region
      $region21: #{tpu_custom_call.1} parent=5 // pred_check
        _
      $region22: #{tpu_custom_call.1} parent=5 // pred_check_branch
        %110 = sbr.rel (%p107) target = $region24
      $region23: #{tpu_custom_call.1} parent=5 // pred_region
        %s111 = ssub.s32 %s13, 1
        %s112 = sand.u32 %s26, 1
        %s113 = scalar_lea.sflag [#allocation3], %s112
        %s114 = sand.u32 %s26, 1
        %s115 = smul.addr %s114, 16
        %s116 = scalar_lea.vmem [#allocation2], %s115
        // Predicated region
        $region25: #{tpu_custom_call.1} parent=23 // pred_check
          %p117 = pneg %p39
        $region26: #{tpu_custom_call.1} parent=23 // pred_check_branch
          %119 = sbr.rel (%p117) target = $region28
        $region27: #{tpu_custom_call.1} parent=23 // pred_region
          %120 = dma.done %s113, 256
        $region28: #{tpu_custom_call.1} parent=23 // pred_fallthru
          _
        %s121 = sand.u32 %s26, 1
        %s122 = scalar_lea.sflag [#allocation3], %s121
        %s123 = sand.u32 %s26, 1
        %s124 = smul.addr %s123, 16
        %s125 = scalar_lea.vmem [#allocation2], %s124
        %p126 = pneg %p39
        %p127 = pneg %p36
        %p128 = pneg %p65
        %p129 = pneg %p62
        %s130 = sand.u32 %s52, 1
        %s131 = scalar_lea.sflag [#allocation4], %s130
        %s132 = sand.u32 %s52, 1
        %s133 = smul.addr %s132, 16
        %s134 = scalar_lea.vmem [#allocation5], %s133
        %s135 = smul.u32 2, %s18
        %s136 = smul.u32 2, %s18
        %v137 = vld [vmem:[%s116] sm:$0xff]
        %v138 = vld [vmem:[%s116 + $0x8] sm:$0xff]
        %139 = vst [vmem:[%s134] sm:$0xff] %v137
        %140 = vst [vmem:[%s134 + $0x8] sm:$0xff] %v138
        %s141 = sand.u32 %s52, 1
        %s142 = scalar_lea.sflag [#allocation4], %s141
        %s143 = sand.u32 %s52, 1
        %s144 = smul.addr %s143, 16
        %s145 = scalar_lea.vmem [#allocation5], %s144
        // Predicated region
        $region29: #{tpu_custom_call.1} parent=23 // pred_check
          %p146 = pneg %p62
        $region30: #{tpu_custom_call.1} parent=23 // pred_check_branch
          %148 = sbr.rel (%p146) target = $region32
        $region31: #{tpu_custom_call.1} parent=23 // pred_region
          %s149 = smul.u32 2, %s18
          %s151 = ssub.s32 256, 256
          %152 = vsyncadd %s142, %s151
          %s153 = smul.addr %s149, 128
          %s154 = scalar_lea.hbm %s1, %s153
          %s155 = sshll.u32 %s145, 4
          %s156 = int_to_ptr.vmem [resolvable:$true] %s155
          %161 = dma.vmem_to_hbm [thread:$0]  %s156, 256, %s154, %s142, 128, 128, 8
        $region32: #{tpu_custom_call.1} parent=23 // pred_fallthru
          _
      $region24: #{tpu_custom_call.1} parent=5 // pred_fallthru
        _
      %p162 = scmp.le.s32.totalorder 2, %s13
      // Predicated region
      $region33: #{tpu_custom_call.1} parent=5 // pred_check
        %p163 = pneg %p162
      $region34: #{tpu_custom_call.1} parent=5 // pred_check_branch
        %165 = sbr.rel (%p163) target = $region36
      $region35: #{tpu_custom_call.1} parent=5 // pred_region
        %s166 = ssub.s32 %s13, 2
        // Predicated region
        $region37: #{tpu_custom_call.1} parent=35 // pred_check
          %p167 = pneg %p68
        $region38: #{tpu_custom_call.1} parent=35 // pred_check_branch
          %169 = sbr.rel (%p167) target = $region40
        $region39: #{tpu_custom_call.1} parent=35 // pred_region
          %s170 = sand.u32 %s53, 1
          %s171 = scalar_lea.sflag [#allocation4], %s170
          %s172 = sand.u32 %s53, 1
          %s173 = smul.addr %s172, 16
          %s174 = scalar_lea.vmem [#allocation5], %s173
          %175 = dma.done %s171, 256
        $region40: #{tpu_custom_call.1} parent=35 // pred_fallthru
          _
      $region36: #{tpu_custom_call.1} parent=5 // pred_fallthru
        _
    $region6: #{tpu_custom_call.1} parent=1 // loop_footer
      %s17 = sadd.s32 1, %s13
    $region7: #{tpu_custom_call.1} parent=1 // loop_footer_branch
      %12 = sbr.rel target = $region3
    $region8: #{tpu_custom_call.1} parent=1 // loop_exit
      _
    %176 = vsyncpa [#allocation3], 1
    %s177 = scalar_lea.sflag [#allocation3], 1
    %178 = vsyncpa %s177, 1
    %179 = vsyncpa [#allocation4], 1
    %s180 = scalar_lea.sflag [#allocation4], 1
    %181 = vsyncpa %s180, 1

</llo_original>
